<compile_context>
chip_gen: v6e
topology: v6e:2x2x1
jax: 0.10.0
libtpu: 0.0.40
codegen_flags: <defaults>
</compile_context>

<pallas_src>
import jax
import jax.numpy as jnp
from jax import lax
from jax.experimental import pallas as pl
from jax.experimental.pallas import tpu as pltpu


def _socs_mask_kernel(x_ref, o_ref):
    # Zero odd (global) column indices.  Lane-axis block offsets are always
    # even (tile_n is either the full width or an even multiple of 128), so
    # the local column parity equals the global column parity.
    x = x_ref[...]
    col = lax.broadcasted_iota(jnp.int32, x.shape, dimension=1)
    o_ref[...] = jnp.where(col % 2 == 0, x, jnp.zeros_like(x))


_TILE_N_CAP = 2048          # lane tile when slicing columns (even, mult of 128)
_FULL_ROW_N_CAP = 4096      # widths up to this run as full rows (one lane block)
_TILE_BYTES_TARGET = 4 << 20   # ~4 MiB per block (review: amortize step cost)
_VMEM_LIMIT_BYTES = 32 << 20   # explicit scoped-VMEM limit; safe on v5e/v6e/v7x
_SMALL_INPUT_ELEMS = 1 << 16   # below this, plain JAX beats pallas_call overhead
_FLAT_WIDTHS = (4096, 2048, 1024, 512, 256, 128)


def _even_mask_multiply(x: jax.Array) -> jax.Array:
    """Run the parity-mask kernel on a 2-D array (zero odd columns)."""
    b, n = x.shape
    itemsize = jnp.dtype(x.dtype).itemsize

    if n <= _FULL_ROW_N_CAP:
        tile_n = n  # full rows: maximal contiguous bursts, no ragged col block
    else:
        tile_n = _TILE_N_CAP
        # Parity safety: when the lane axis is tiled, every block's lane
        # offset (j * tile_n) must be even so local parity == global parity.
        assert tile_n % 2 == 0 and tile_n % 128 == 0

    # Pick tile_b so each block is ~_TILE_BYTES_TARGET, rounded to a multiple
    # of 8 sublanes (or the full batch extent).
    rows = max(8, ((_TILE_BYTES_TARGET // (tile_n * itemsize)) // 8) * 8)
    tile_b = b if b <= rows else rows

    grid = (pl.cdiv(b, tile_b), pl.cdiv(n, tile_n))
    return pl.pallas_call(
        _socs_mask_kernel,
        out_shape=jax.ShapeDtypeStruct(x.shape, x.dtype),
        grid=grid,
        in_specs=[pl.BlockSpec((tile_b, tile_n), lambda i, j: (i, j))],
        out_specs=pl.BlockSpec((tile_b, tile_n), lambda i, j: (i, j)),
        compiler_params=pltpu.CompilerParams(
            dimension_semantics=("parallel", "parallel"),
            vmem_limit_bytes=_VMEM_LIMIT_BYTES),
    )(x)


def _plain_mask_multiply(socs: jax.Array) -> jax.Array:
    n = socs.shape[1]
    mask = (jnp.arange(n) % 2 == 0).astype(socs.dtype)[None, :]
    return socs * mask


def socs_transform(socs: jax.Array, real: bool = True, *,
                   force_pallas: bool = False) -> jax.Array:
    """Forward pass of SocsTransform.

    real=True : return socs with odd SOC components zeroed.
    real=False: identity (PyTorch _transform_socs just returns socs).
    force_pallas=True bypasses the small-input escape hatch (for testing).
    """
    if not real:
        return socs
    assert socs.ndim == 2, "expected socs of shape (batch, nsocs)"
    b, n = socs.shape
    total = b * n
    if total == 0:
        return socs

    # Small-input escape hatch: pallas_call prologue dwarfs the work, and XLA
    # will fuse the constant-mask multiply into the producer.
    if not force_pallas and total < _SMALL_INPUT_ELEMS:
        return _plain_mask_multiply(socs)

    # Lane-dense flatten for any even nsocs: parity(flat index) ==
    # parity(column index) because nsocs and W are both even.  Prefer the
    # widest W that still leaves >= 2 row-blocks for the v7x megacore split.
    if n % 2 == 0:
        chosen = None
        for w in _FLAT_WIDTHS:
            if total % w == 0:
                chosen = w
                if total // w >= 2:
                    break
        if chosen is not None:
            y = _even_mask_multiply(socs.reshape(total // chosen, chosen))
            return y.reshape(b, n)

    # General tiled path for wide rows (odd widths, or even widths whose total
    # is not a multiple of 128).
    if n >= 128:
        return _even_mask_multiply(socs)

    # Narrow, non-flattenable widths: masked partial stores would dominate the
    # kernel; let XLA handle the trivial multiply instead.
    return _plain_mask_multiply(socs)


def _reference(socs: jax.Array) -> jax.Array:
    n = socs.shape[1]
    mask = (jnp.arange(n) % 2 == 0).astype(socs.dtype)[None, :]
    return socs * mask


if __name__ == "__main__":
    key = jax.random.PRNGKey(0)

    # Module-realistic small shape: (batch, nsocs) = (2, 16).
    batch, nsocs = 2, 16
    socs = jax.random.normal(key, (batch, nsocs), dtype=jnp.float32)

    # Default path (small-input escape hatch → plain JAX).
    out = jax.block_until_ready(socs_transform(socs))
    assert out.shape == socs.shape and out.dtype == socs.dtype
    assert jnp.allclose(out, _reference(socs)), "mismatch vs reference (2,16)"

    # real=False branch is the identity.
    ident = jax.block_until_ready(socs_transform(socs, real=False))
    assert jnp.array_equal(ident, socs), "real=False must be identity"

    # Force the Pallas kernel on small shapes to exercise the lane-dense
    # flatten path (64*16 = 1024 -> (2, 512) slab; 16*2048 -> (8, 4096) slab).
    for b2, n2 in ((64, 16), (16, 2048)):
        k2 = jax.random.fold_in(key, b2 * 100003 + n2)
        x2 = jax.random.normal(k2, (b2, n2), dtype=jnp.float32)
        o2 = jax.block_until_ready(socs_transform(x2, force_pallas=True))
        assert o2.shape == x2.shape and o2.dtype == x2.dtype
        assert jnp.allclose(o2, _reference(x2)), f"mismatch at {(b2, n2)}"

    # Shapes large enough to take the Pallas paths by default:
    #   (512, 384)  -> even width, flattens to (48, 4096) lane-dense slabs.
    #   (128, 2049) -> odd width, general tiled path (full-row blocks).
    for b3, n3 in ((512, 384), (128, 2049)):
        k3 = jax.random.fold_in(key, b3 * 7919 + n3)
        x3 = jax.random.normal(k3, (b3, n3), dtype=jnp.float32)
        o3 = jax.block_until_ready(socs_transform(x3))
        assert o3.shape == x3.shape and o3.dtype == x3.dtype
        assert jnp.allclose(o3, _reference(x3)), f"mismatch at {(b3, n3)}"

    print("KERNEL_OK")
</pallas_src>

<mosaic_0001>
module attributes {stable_mosaic.version = 11 : i64} {
  func.func @_socs_mask_kernel(%arg0: i32, %arg1: i32, %arg2: memref<2x512xf32, #tpu.memory_space<vmem>>, %arg3: memref<2x512xf32, #tpu.memory_space<vmem>>) attributes {dimension_semantics = [#tpu.dimension_semantics<parallel>, #tpu.dimension_semantics<parallel>], iteration_bounds = array<i64: 1, 1>, scalar_prefetch = 0 : i64, scratch_operands = 0 : i64, tpu.core_type = #tpu.core_type<tc>, window_params = [{transform_indices = @transform_0, window_bounds = array<i64: 2, 512>}, {transform_indices = @transform_1, window_bounds = array<i64: 2, 512>}]} {
    %c0 = arith.constant 0 : index
    %c0_0 = arith.constant 0 : index
    %0 = vector.load %arg2[%c0, %c0_0] : memref<2x512xf32, #tpu.memory_space<vmem>>, vector<2x512xf32>
    %1 = tpu.iota {dimensions = array<i32: 1>} : vector<2x512xi32>
    %c2_i32 = arith.constant 2 : i32
    %c0_i32 = arith.constant 0 : i32
    %2 = arith.cmpi eq, %c2_i32, %c0_i32 : i32
    %c1_i32 = arith.constant 1 : i32
    %3 = arith.select %2, %c1_i32, %c2_i32 : i32
    %4 = vector.broadcast %3 : i32 to vector<2x512xi32>
    %5 = arith.remsi %1, %4 : vector<2x512xi32>
    %c0_i32_1 = arith.constant 0 : i32
    %6 = vector.broadcast %c0_i32_1 : i32 to vector<2x512xi32>
    %7 = arith.cmpi ne, %5, %6 : vector<2x512xi32>
    %c0_i32_2 = arith.constant 0 : i32
    %8 = vector.broadcast %c0_i32_2 : i32 to vector<2x512xi32>
    %9 = arith.cmpi slt, %5, %8 : vector<2x512xi32>
    %c0_i32_3 = arith.constant 0 : i32
    %10 = arith.cmpi slt, %3, %c0_i32_3 : i32
    %11 = vector.broadcast %10 : i1 to vector<2x512xi1>
    %12 = vector.broadcast %11 : vector<2x512xi1> to vector<2x512xi1>
    %13 = arith.xori %9, %12 : vector<2x512xi1>
    %14 = arith.andi %13, %7 : vector<2x512xi1>
    %15 = vector.broadcast %3 : i32 to vector<2x512xi32>
    %16 = arith.addi %5, %15 : vector<2x512xi32>
    %17 = arith.select %14, %16, %5 : vector<2x512xi1>, vector<2x512xi32>
    %c0_i32_4 = arith.constant 0 : i32
    %18 = vector.broadcast %c0_i32_4 : i32 to vector<2x512xi32>
    %19 = arith.cmpi eq, %17, %18 : vector<2x512xi32>
    %cst = arith.constant 0.000000e+00 : f32
    %20 = vector.broadcast %cst : f32 to vector<2x512xf32>
    %21 = arith.select %19, %0, %20 : vector<2x512xi1>, vector<2x512xf32>
    %c0_5 = arith.constant 0 : index
    %c0_6 = arith.constant 0 : index
    %22 = vector.load %arg3[%c0_5, %c0_6] : memref<2x512xf32, #tpu.memory_space<vmem>>, vector<2x512xf32>
    tpu.vector_store %arg3[%c0_5, %c0_6], %21 {strides = array<i32>} : memref<2x512xf32, #tpu.memory_space<vmem>>, vector<2x512xf32>,
    return
  }
  func.func @transform_0(%arg0: i32, %arg1: i32) -> (i32, i32) {
    %c0_i32 = arith.constant 0 : i32
    return %arg0, %arg1 : i32, i32
  }
  func.func @transform_1(%arg0: i32, %arg1: i32) -> (i32, i32) {
    %c0_i32 = arith.constant 0 : i32
    return %arg0, %arg1 : i32, i32
  }
}

</mosaic_0001>

<llo_original>
// kernel: tpu_custom_call.1
$region0: #{tpu_custom_call.1}
  #allocation0 [shape = 'u32[]', space=smem, size = 0x4, offset = 0x4, fixed_abs, tag = 'smem constant byte address 0x4 - core index']
  #allocation1 [shape = 'u32[144,128]{1,0:T(1,128)}', space=vmem, size = 0x12000, scoped, tag = 'internal scratch']
  %s0 = inlined_call_operand.hbm [shape: f32[2,512], index: 0, kind: input, shape index: {}]
  %s1 = inlined_call_operand.hbm [shape: f32[2,512], index: 1, kind: output, shape index: {}]
  %s2 = sld [smem:[#allocation0]]
  $region18: #{tpu_custom_call.1} parent=0
    _
  %s4 = ssub.s32 1, %s2
  %s5 = scalar_select 0, %s4, %s2
  $region1: #{tpu_custom_call.1} parent=0
    #allocation2 [shape = 'u8[4096]{0}', space=vmem, size = 0x1000, scoped, tag = 'input window, operand 0, single buffered']
    #allocation3 [shape = 's32[1]{0}', space=sflag, size = 0x4, scoped, tag = 'scoped memory for tpu_custom_call.1']
    #allocation4 [shape = 's32[1]{0}', space=sflag, size = 0x4, scoped, tag = 'scoped memory for tpu_custom_call.1']
    #allocation5 [shape = 'u8[4096]{0}', space=vmem, size = 0x1000, scoped, tag = 'output window, operand 0, single buffered']
    %6 = vsyncpa [#allocation3], 0
    %7 = vsyncpa [#allocation4], 0
    // Predicated region
    $region2: #{tpu_custom_call.1} parent=1 // pred_check
      _
    $region3: #{tpu_custom_call.1} parent=1 // pred_check_branch
      %9 = sbr.rel (0) target = $region5
    $region4: #{tpu_custom_call.1} parent=1 // pred_region
      %s11 = ssub.s32 128, 128
      %12 = vsyncadd [#allocation3], %s11
      %s14 = sshll.u32 [#allocation2], 4
      %s15 = int_to_ptr.vmem [resolvable:$true] %s14
      %17 = dma.hbm_to_vmem [thread:$0]  %s0, 128, %s15, [#allocation3]
    $region5: #{tpu_custom_call.1} parent=1 // pred_fallthru
      _
    // Predicated region
    $region6: #{tpu_custom_call.1} parent=1 // pred_check
      _
    $region7: #{tpu_custom_call.1} parent=1 // pred_check_branch
      %19 = sbr.rel (0) target = $region9
    $region8: #{tpu_custom_call.1} parent=1 // pred_region
      %20 = dma.done [#allocation3], 128
    $region9: #{tpu_custom_call.1} parent=1 // pred_fallthru
      _
    %v21 = vld [vmem:[#allocation2] sm:$0xff]
    %v22 = vlaneseq
    %v23 = vand.u32 %v22, 127
    %v24 = vadd.s32 %v23, 128
    %v25 = vadd.s32 %v23, 256
    %v26 = vadd.s32 %v23, 384
    %vm27 = vcmp.lt.s32.totalorder %v23, 0
    %v28 = vsub.s32 0, %v23
    %v29 = vsel %vm27, %v28, %v23
    %v30 = vshrl.u32 %v29, 1
    %v31 = vand.u32 %v29, 1
    %v32 = vsub.s32 0, %v31
    %v33 = vsel %vm27, %v32, %v31
    %vm34 = vcmp.lt.s32.totalorder %v24, 0
    %v35 = vsub.s32 0, %v24
    %v36 = vsel %vm34, %v35, %v24
    %v37 = vshrl.u32 %v36, 1
    %v38 = vand.u32 %v36, 1
    %v39 = vsub.s32 0, %v38
    %v40 = vsel %vm34, %v39, %v38
    %vm41 = vcmp.lt.s32.totalorder %v25, 0
    %v42 = vsub.s32 0, %v25
    %v43 = vsel %vm41, %v42, %v25
    %v44 = vshrl.u32 %v43, 1
    %v45 = vand.u32 %v43, 1
    %v46 = vsub.s32 0, %v45
    %v47 = vsel %vm41, %v46, %v45
    %vm48 = vcmp.lt.s32.totalorder %v26, 0
    %v49 = vsub.s32 0, %v26
    %v50 = vsel %vm48, %v49, %v26
    %v51 = vshrl.u32 %v50, 1
    %v52 = vand.u32 %v50, 1
    %v53 = vsub.s32 0, %v52
    %v54 = vsel %vm48, %v53, %v52
    %vm55 = vcmp.ne.s32.totalorder %v33, 0
    %vm56 = vcmp.ne.s32.totalorder %v40, 0
    %vm57 = vcmp.ne.s32.totalorder %v47, 0
    %vm58 = vcmp.ne.s32.totalorder %v54, 0
    %vm59 = vcmp.lt.s32.totalorder %v33, 0
    %vm60 = vcmp.lt.s32.totalorder %v40, 0
    %vm61 = vcmp.lt.s32.totalorder %v47, 0
    %vm62 = vcmp.lt.s32.totalorder %v54, 0
    %vm63 = vmand %vm59, %vm55
    %vm64 = vmand %vm60, %vm56
    %vm65 = vmand %vm61, %vm57
    %vm66 = vmand %vm62, %vm58
    %v67 = vadd.s32 %v33, 2
    %v68 = vadd.s32 %v40, 2
    %v69 = vadd.s32 %v47, 2
    %v70 = vadd.s32 %v54, 2
    %v71 = vsel %vm63, %v67, %v33
    %v72 = vsel %vm64, %v68, %v40
    %v73 = vsel %vm65, %v69, %v47
    %v74 = vsel %vm66, %v70, %v54
    %vm75 = vcmp.eq.s32.totalorder %v71, 0
    %vm76 = vcmp.eq.s32.totalorder %v72, 0
    %vm77 = vcmp.eq.s32.totalorder %v73, 0
    %vm78 = vcmp.eq.s32.totalorder %v74, 0
    %v80 = vcombine.high %v21, %v21
    %v82 = vunpack.c.l.s4 1983009808
    %v83 = vunpack.c.0.s8 %v82
    %v84 = vlaneseq
    %v85 = vshrl.u32 %v84, 7
    %v86 = vsub.s32 %v83, %v85
    %v87 = vrot.slane %v21, %v86
    %v89 = vunpack.c.l.s4 1983009808
    %v90 = vunpack.c.0.s8 %v89
    %v91 = vlaneseq
    %v92 = vshrl.u32 %v91, 7
    %v93 = vsub.s32 %v90, %v92
    %v94 = vrot.slane %v80, %v93
    %v95 = vcombine.high %v87, %v87
    %v96 = vcombine.high %v94, %v94
    %v101 = vsel %vm75, %v87, 0.0
    %v102 = vsel %vm76, %v95, 0.0
    %v103 = vsel %vm77, %v94, 0.0
    %v104 = vsel %vm78, %v96, 0.0
    %v109 = vcombine.low %v101, %v102
    %v110 = vcombine.low %v103, %v104
    %v112 = vunpack.c.l.s4 1983009808
    %v113 = vunpack.c.0.s8 %v112
    %v114 = vlaneseq
    %v115 = vshrl.u32 %v114, 7
    %v116 = vsub.s32 %v113, %v115
    %v117 = vrot.slane %v109, %v116
    %v119 = vunpack.c.l.s4 1983009808
    %v120 = vunpack.c.0.s8 %v119
    %v121 = vlaneseq
    %v122 = vshrl.u32 %v121, 7
    %v123 = vsub.s32 %v120, %v122
    %v124 = vrot.slane %v110, %v123
    %v125 = vcombine.low %v117, %v124
    %127 = vst [vmem:[#allocation5] sm:$0xff] %v125
    // Predicated region
    $region10: #{tpu_custom_call.1} parent=1 // pred_check
      _
    $region11: #{tpu_custom_call.1} parent=1 // pred_check_branch
      %129 = sbr.rel (0) target = $region13
    $region12: #{tpu_custom_call.1} parent=1 // pred_region
      %s131 = ssub.s32 128, 128
      %132 = vsyncadd [#allocation4], %s131
      %s134 = sshll.u32 [#allocation5], 4
      %s135 = int_to_ptr.vmem [resolvable:$true] %s134
      %137 = dma.vmem_to_hbm [thread:$0]  %s135, 128, %s1, [#allocation4]
    $region13: #{tpu_custom_call.1} parent=1 // pred_fallthru
      _
    // Predicated region
    $region14: #{tpu_custom_call.1} parent=1 // pred_check
      _
    $region15: #{tpu_custom_call.1} parent=1 // pred_check_branch
      %139 = sbr.rel (0) target = $region17
    $region16: #{tpu_custom_call.1} parent=1 // pred_region
      %140 = dma.done [#allocation4], 128
    $region17: #{tpu_custom_call.1} parent=1 // pred_fallthru
      _
    %141 = vsyncpa [#allocation3], 1
    %142 = vsyncpa [#allocation4], 1

</llo_original>
